<compile_context>
chip_gen: v6e
topology: v6e:2x2x1
jax: 0.10.0
libtpu: 0.0.40
codegen_flags: <defaults>
</compile_context>

<pallas_src>
import functools

import jax
import jax.numpy as jnp
from jax.experimental import pallas as pl
from jax.experimental.pallas import tpu as pltpu


def _round_up(x, m):
    return ((x + m - 1) // m) * m


def _maybe_pad2(a, rows, cols):
    """Zero-pad a 2-D array only if it is not already (rows, cols)."""
    if a.shape == (rows, cols):
        return a
    return jnp.pad(a, ((0, rows - a.shape[0]), (0, cols - a.shape[1])))


# ----- fused kernel: threshold/mask the weight on-tile, then matmul + bias -----
def _fused_linear_threshold_kernel(x_ref, w_ref, m_ref, f_ref, b_ref, o_ref,
                                   acc_ref, *, threshold):
    k = pl.program_id(2)

    @pl.when(k == 0)
    def _():
        # Fold bias into the accumulator init (saves a separate epilogue add).
        acc_ref[...] = jnp.broadcast_to(b_ref[...], acc_ref.shape).astype(jnp.float32)

    w_raw = w_ref[...]                                              # [tn, tk] f32
    w_eff = jnp.where(m_ref[...] != 0, w_raw, f_ref[...])           # mask / fixed
    w_eff = jnp.where(jnp.abs(w_raw) < threshold,                   # threshold on RAW w
                      jnp.zeros_like(w_eff), w_eff)

    # Contract x:[tm,tk] (dim 1) with w_eff:[tn,tk] (dim 1) -> [tm,tn].
    # MXU consumes the [OUT,IN] layout directly; no transpose materialized.
    acc_ref[...] += jax.lax.dot_general(
        x_ref[...], w_eff,
        dimension_numbers=(((1,), (1,)), ((), ())),
        preferred_element_type=jnp.float32,
    )

    @pl.when(k == pl.num_programs(2) - 1)
    def _():
        o_ref[...] = acc_ref[...].astype(o_ref.dtype)


# ----- plain matmul+bias kernel (large-batch path; w_eff precomputed by XLA) ---
def _matmul_bias_kernel(x_ref, w_ref, b_ref, o_ref, acc_ref):
    k = pl.program_id(2)

    @pl.when(k == 0)
    def _():
        acc_ref[...] = jnp.broadcast_to(b_ref[...], acc_ref.shape).astype(jnp.float32)

    acc_ref[...] += jax.lax.dot_general(
        x_ref[...], w_ref[...],
        dimension_numbers=(((1,), (1,)), ((), ())),
        preferred_element_type=jnp.float32,
    )

    @pl.when(k == pl.num_programs(2) - 1)
    def _():
        o_ref[...] = acc_ref[...].astype(o_ref.dtype)


def linear_threshold(x, weight, mask, fixed, bias, threshold,
                     *, tm_max=512, tn_max=512, tk_max=1024):
    """x:[B,IN], weight/mask/fixed:[OUT,IN], bias:[OUT] -> [B,OUT] (f32)."""
    B, IN = x.shape
    OUT, _ = weight.shape
    f32 = jnp.float32
    thr = float(threshold)

    # ---- tile selection: (8,128)-aligned, capped so every generation fits ----
    tm = min(tm_max, _round_up(B, 8))
    tn = min(tn_max, _round_up(OUT, 128))
    tk = min(tk_max, _round_up(IN, 128))
    Bp = _round_up(B, tm)
    OUTp = _round_up(OUT, tn)
    INp = _round_up(IN, tk)
    # v7x has 2 TensorCores: if the parallel (i,j) grid collapses to a single
    # tile, split OUT in two (stays a multiple of 128) so both TCs get work.
    if (Bp // tm) * (OUTp // tn) == 1 and OUTp % 256 == 0:
        tn = OUTp // 2
    grid_i, grid_j, grid_k = Bp // tm, OUTp // tn, INp // tk

    # ---- pad only what actually needs padding (zero K-padding is benign:
    #      raw weight pads to 0 so thresholding/mask keeps w_eff = 0 there) ----
    x_p = _maybe_pad2(x.astype(f32), Bp, INp)
    b_row = bias.astype(f32).reshape(1, OUT)
    b_p = _maybe_pad2(b_row, 1, OUTp)

    fuse = grid_i <= 2  # weight streamed at most twice -> fuse threshold on-tile

    if fuse:
        w_p = _maybe_pad2(weight.astype(f32), OUTp, INp)
        m_p = _maybe_pad2(mask.astype(jnp.int8), OUTp, INp)
        fx_p = _maybe_pad2(fixed.astype(f32), OUTp, INp)

        vmem_est = (2 * tm * tk * 4            # x tiles (double-buffered)
                    + 2 * tn * tk * (4 + 1 + 4)  # weight + mask + fixed tiles
                    + 2 * tn * 4               # bias tiles
                    + 2 * tm * tn * 4          # output tiles
                    + tm * tn * 4)             # accumulator scratch
        out_p = pl.pallas_call(
            functools.partial(_fused_linear_threshold_kernel, threshold=thr),
            out_shape=jax.ShapeDtypeStruct((Bp, OUTp), f32),
            grid_spec=pltpu.PrefetchScalarGridSpec(
                num_scalar_prefetch=0,
                grid=(grid_i, grid_j, grid_k),          # reduction axis last
                in_specs=[
                    pl.BlockSpec((tm, tk), lambda i, j, k: (i, k)),   # x
                    pl.BlockSpec((tn, tk), lambda i, j, k: (j, k)),   # raw weight
                    pl.BlockSpec((tn, tk), lambda i, j, k: (j, k)),   # mask int8
                    pl.BlockSpec((tn, tk), lambda i, j, k: (j, k)),   # fixed
                    pl.BlockSpec((1, tn), lambda i, j, k: (0, j)),    # bias
                ],
                out_specs=pl.BlockSpec((tm, tn), lambda i, j, k: (i, j)),
                scratch_shapes=[pltpu.VMEM((tm, tn), jnp.float32)],
            ),
            compiler_params=pltpu.CompilerParams(
                dimension_semantics=("parallel", "parallel", "arbitrary"),
                vmem_limit_bytes=min(max(2 * vmem_est, 32 << 20), 48 << 20)),
        )(x_p, w_p, m_p, fx_p, b_p)
    else:
        # Large batch: w_eff would be re-streamed grid_i times by the fused path.
        # Compute it once with XLA-fused elementwise ops (single HBM pass, no
        # extra pallas_call) and stream the single weight-sized array.
        w_f32 = weight.astype(f32)
        w_eff = jnp.where(mask, w_f32, fixed.astype(f32))
        w_eff = jnp.where(jnp.abs(w_f32) < thr, jnp.zeros_like(w_eff), w_eff)
        w_p = _maybe_pad2(w_eff, OUTp, INp)

        vmem_est = (2 * tm * tk * 4 + 2 * tn * tk * 4 + 2 * tn * 4
                    + 2 * tm * tn * 4 + tm * tn * 4)
        out_p = pl.pallas_call(
            _matmul_bias_kernel,
            out_shape=jax.ShapeDtypeStruct((Bp, OUTp), f32),
            grid_spec=pltpu.PrefetchScalarGridSpec(
                num_scalar_prefetch=0,
                grid=(grid_i, grid_j, grid_k),
                in_specs=[
                    pl.BlockSpec((tm, tk), lambda i, j, k: (i, k)),   # x
                    pl.BlockSpec((tn, tk), lambda i, j, k: (j, k)),   # w_eff
                    pl.BlockSpec((1, tn), lambda i, j, k: (0, j)),    # bias
                ],
                out_specs=pl.BlockSpec((tm, tn), lambda i, j, k: (i, j)),
                scratch_shapes=[pltpu.VMEM((tm, tn), jnp.float32)],
            ),
            compiler_params=pltpu.CompilerParams(
                dimension_semantics=("parallel", "parallel", "arbitrary"),
                vmem_limit_bytes=min(max(2 * vmem_est, 32 << 20), 48 << 20)),
        )(x_p, w_p, b_p)

    if (Bp, OUTp) == (B, OUT):
        return out_p
    return out_p[:B, :OUT]


def linear_threshold_ref(x, weight, mask, fixed, bias, threshold):
    """Pure-JAX reference mirroring the PyTorch forward."""
    w = jnp.where(mask, weight, fixed)
    w = jnp.where(jnp.abs(weight) < threshold, 0.0, w)
    return x @ w.T + bias


if __name__ == "__main__":
    key = jax.random.PRNGKey(0)
    kx, kw, km, kf, kb = jax.random.split(key, 5)

    B, IN, OUT = 8, 32, 16
    threshold = 0.3

    x = jax.random.normal(kx, (B, IN), dtype=jnp.float32)
    # Deterministic "parameters" standing in for nn.Linear init / buffers.
    weight = jax.random.normal(kw, (OUT, IN), dtype=jnp.float32) * 0.5
    mask = jax.random.bernoulli(km, 0.7, (OUT, IN))                  # bool buffer
    fixed = jax.random.normal(kf, (OUT, IN), dtype=jnp.float32) * 0.1
    bias = jax.random.normal(kb, (OUT,), dtype=jnp.float32) * 0.1

    # Fused path (LinearFixedParams semantics).
    out = linear_threshold(x, weight, mask, fixed, bias, threshold)
    out = jax.block_until_ready(out)
    ref = linear_threshold_ref(x, weight, mask, fixed, bias, threshold)
    assert out.shape == (B, OUT)
    assert jnp.allclose(out, ref, atol=1e-5, rtol=1e-5), "mismatch vs reference"

    # Plain nn.Linear path (mask=ones, fixed=zeros).
    out2 = linear_threshold(x, weight, jnp.ones_like(mask), jnp.zeros_like(fixed),
                            bias, threshold)
    out2 = jax.block_until_ready(out2)
    ref2 = linear_threshold_ref(x, weight, jnp.ones_like(mask),
                                jnp.zeros_like(fixed), bias, threshold)
    assert jnp.allclose(out2, ref2, atol=1e-5, rtol=1e-5), "mismatch vs ref (plain)"

    # Large-batch fallback path (grid_i > 2): force small tm to exercise it.
    B3 = 32
    x3 = jax.random.normal(kx, (B3, IN), dtype=jnp.float32)
    out3 = linear_threshold(x3, weight, mask, fixed, bias, threshold, tm_max=8)
    out3 = jax.block_until_ready(out3)
    ref3 = linear_threshold_ref(x3, weight, mask, fixed, bias, threshold)
    assert jnp.allclose(out3, ref3, atol=1e-5, rtol=1e-5), "mismatch vs ref (large-B)"

    print("KERNEL_OK")
</pallas_src>

<mosaic_0001>
module attributes {stable_mosaic.version = 11 : i64} {
  func.func @_fused_linear_threshold_kernel(%arg0: i32, %arg1: i32, %arg2: i32, %arg3: memref<8x128xf32, #tpu.memory_space<vmem>>, %arg4: memref<128x128xf32, #tpu.memory_space<vmem>>, %arg5: memref<128x128xi8, #tpu.memory_space<vmem>>, %arg6: memref<128x128xf32, #tpu.memory_space<vmem>>, %arg7: memref<1x128xf32, #tpu.memory_space<vmem>>, %arg8: memref<8x128xf32, #tpu.memory_space<vmem>>, %arg9: memref<8x128xf32, #tpu.memory_space<vmem>>) attributes {dimension_semantics = [#tpu.dimension_semantics<parallel>, #tpu.dimension_semantics<parallel>, #tpu.dimension_semantics<arbitrary>], iteration_bounds = array<i64: 1, 1, 1>, scalar_prefetch = 0 : i64, scratch_operands = 1 : i64, tpu.core_type = #tpu.core_type<tc>, window_params = [{transform_indices = @transform_0, window_bounds = array<i64: 8, 128>}, {transform_indices = @transform_1, window_bounds = array<i64: 128, 128>}, {transform_indices = @transform_2, window_bounds = array<i64: 128, 128>}, {transform_indices = @transform_3, window_bounds = array<i64: 128, 128>}, {transform_indices = @transform_4, window_bounds = array<i64: 1, 128>}, {transform_indices = @transform_5, window_bounds = array<i64: 8, 128>}]} {
    %c0_i32 = arith.constant 0 : i32
    %0 = arith.cmpi eq, %arg2, %c0_i32 : i32
    %1 = arith.extui %0 : i1 to i32
    %c0_i32_0 = arith.constant 0 : i32
    %2 = arith.cmpi ne, %1, %c0_i32_0 : i32
    scf.if %2 {
      %c0_16 = arith.constant 0 : index
      %c0_17 = arith.constant 0 : index
      %22 = vector.load %arg7[%c0_16, %c0_17] : memref<1x128xf32, #tpu.memory_space<vmem>>, vector<1x128xf32>
      %23 = vector.shape_cast %22 : vector<1x128xf32> to vector<1x128xf32>
      %24 = vector.broadcast %23 : vector<1x128xf32> to vector<8x128xf32>
      %c0_18 = arith.constant 0 : index
      %c0_19 = arith.constant 0 : index
      %25 = vector.load %arg9[%c0_18, %c0_19] : memref<8x128xf32, #tpu.memory_space<vmem>>, vector<8x128xf32>
      tpu.vector_store %arg9[%c0_18, %c0_19], %24 {strides = array<i32>} : memref<8x128xf32, #tpu.memory_space<vmem>>, vector<8x128xf32>,
    } else {
    }
    %c0 = arith.constant 0 : index
    %c0_1 = arith.constant 0 : index
    %3 = vector.load %arg4[%c0, %c0_1] : memref<128x128xf32, #tpu.memory_space<vmem>>, vector<128x128xf32>
    %c0_2 = arith.constant 0 : index
    %c0_3 = arith.constant 0 : index
    %4 = vector.load %arg5[%c0_2, %c0_3] : memref<128x128xi8, #tpu.memory_space<vmem>>, vector<128x128xi8>
    %c0_i8 = arith.constant 0 : i8
    %5 = vector.broadcast %c0_i8 : i8 to vector<128x128xi8>
    %6 = arith.cmpi ne, %4, %5 : vector<128x128xi8>
    %c0_4 = arith.constant 0 : index
    %c0_5 = arith.constant 0 : index
    %7 = vector.load %arg6[%c0_4, %c0_5] : memref<128x128xf32, #tpu.memory_space<vmem>>, vector<128x128xf32>
    %8 = arith.select %6, %3, %7 : vector<128x128xi1>, vector<128x128xf32>
    %9 = math.absf %3 : vector<128x128xf32>
    %cst = arith.constant 3.000000e-01 : f32
    %10 = vector.broadcast %cst : f32 to vector<128x128xf32>
    %11 = arith.cmpf olt, %9, %10 : vector<128x128xf32>
    %cst_6 = arith.constant 0.000000e+00 : f32
    %12 = vector.broadcast %cst_6 : f32 to vector<128x128xf32>
    %13 = arith.select %11, %12, %8 : vector<128x128xi1>, vector<128x128xf32>
    %c0_7 = arith.constant 0 : index
    %c0_8 = arith.constant 0 : index
    %14 = vector.load %arg9[%c0_7, %c0_8] : memref<8x128xf32, #tpu.memory_space<vmem>>, vector<8x128xf32>
    %c0_9 = arith.constant 0 : index
    %c0_10 = arith.constant 0 : index
    %15 = vector.load %arg3[%c0_9, %c0_10] : memref<8x128xf32, #tpu.memory_space<vmem>>, vector<8x128xf32>
    %cst_11 = arith.constant dense<0.000000e+00> : vector<8x128xf32>
    %16 = tpu.matmul %15, %13, %cst_11 {dimension_numbers = #tpu.dot_dimension_numbers<[1], [1], [0], [0], [0, 0, 1, 0], [], []>} : vector<8x128xf32>, vector<128x128xf32>, vector<8x128xf32> -> vector<8x128xf32>
    %17 = arith.addf %14, %16 : vector<8x128xf32>
    %c0_12 = arith.constant 0 : index
    %c0_13 = arith.constant 0 : index
    %18 = vector.load %arg9[%c0_12, %c0_13] : memref<8x128xf32, #tpu.memory_space<vmem>>, vector<8x128xf32>
    tpu.vector_store %arg9[%c0_12, %c0_13], %17 {strides = array<i32>} : memref<8x128xf32, #tpu.memory_space<vmem>>, vector<8x128xf32>,
    %c0_i32_14 = arith.constant 0 : i32
    %19 = arith.cmpi eq, %arg2, %c0_i32_14 : i32
    %20 = arith.extui %19 : i1 to i32
    %c0_i32_15 = arith.constant 0 : i32
    %21 = arith.cmpi ne, %20, %c0_i32_15 : i32
    scf.if %21 {
      %c0_16 = arith.constant 0 : index
      %c0_17 = arith.constant 0 : index
      %22 = vector.load %arg9[%c0_16, %c0_17] : memref<8x128xf32, #tpu.memory_space<vmem>>, vector<8x128xf32>
      %c0_18 = arith.constant 0 : index
      %c0_19 = arith.constant 0 : index
      %23 = vector.load %arg8[%c0_18, %c0_19] : memref<8x128xf32, #tpu.memory_space<vmem>>, vector<8x128xf32>
      tpu.vector_store %arg8[%c0_18, %c0_19], %22 {strides = array<i32>} : memref<8x128xf32, #tpu.memory_space<vmem>>, vector<8x128xf32>,
    } else {
    }
    return
  }
  func.func @transform_0(%arg0: i32, %arg1: i32, %arg2: i32) -> (i32, i32) {
    %c0_i32 = arith.constant 0 : i32
    return %arg0, %arg2 : i32, i32
  }
  func.func @transform_1(%arg0: i32, %arg1: i32, %arg2: i32) -> (i32, i32) {
    %c0_i32 = arith.constant 0 : i32
    return %arg1, %arg2 : i32, i32
  }
  func.func @transform_2(%arg0: i32, %arg1: i32, %arg2: i32) -> (i32, i32) {
    %c0_i32 = arith.constant 0 : i32
    return %arg1, %arg2 : i32, i32
  }
  func.func @transform_3(%arg0: i32, %arg1: i32, %arg2: i32) -> (i32, i32) {
    %c0_i32 = arith.constant 0 : i32
    return %arg1, %arg2 : i32, i32
  }
  func.func @transform_4(%arg0: i32, %arg1: i32, %arg2: i32) -> (i32, i32) {
    %c0_i32 = arith.constant 0 : i32
    %c0_i32_0 = arith.constant 0 : i32
    return %c0_i32, %arg1 : i32, i32
  }
  func.func @transform_5(%arg0: i32, %arg1: i32, %arg2: i32) -> (i32, i32) {
    %c0_i32 = arith.constant 0 : i32
    return %arg0, %arg1 : i32, i32
  }
}

</mosaic_0001>

<llo_original>
// kernel: tpu_custom_call.1
$region0: #{tpu_custom_call.1}
  #allocation0 [shape = 'u32[]', space=smem, size = 0x4, offset = 0x4, fixed_abs, tag = 'smem constant byte address 0x4 - core index']
  #allocation1 [shape = 'u32[144,128]{1,0:T(1,128)}', space=vmem, size = 0x12000, scoped, tag = 'internal scratch']
  #allocation2 [shape = 'f32[8,128]{1,0:T(8,128)}', space=vmem, size = 0x1000, scoped, tag = 'scratch operand']
  %s0 = inlined_call_operand.hbm [shape: f32[8,128], index: 0, kind: input, shape index: {}]
  %s1 = inlined_call_operand.hbm [shape: f32[128,128], index: 1, kind: input, shape index: {}]
  %s2 = inlined_call_operand.hbm [shape: s8[128,128], index: 2, kind: input, shape index: {}]
  %s3 = inlined_call_operand.hbm [shape: f32[128,128], index: 3, kind: input, shape index: {}]
  %s4 = inlined_call_operand.vmem [shape: f32[1,128], index: 4, kind: input, shape index: {}]
  %s5 = inlined_call_operand.hbm [shape: f32[8,128], index: 5, kind: output, shape index: {}]
  %s6 = sld [smem:[#allocation0]]
  $region54: #{tpu_custom_call.1} parent=0
    _
  %s8 = ssub.s32 1, %s6
  %s9 = scalar_select 0, %s8, %s6
  $region1: #{tpu_custom_call.1} parent=0
    #allocation3 [shape = 'u8[4096]{0}', space=vmem, size = 0x1000, scoped, tag = 'input window, operand 0, single buffered']
    #allocation4 [shape = 's32[1]{0}', space=sflag, size = 0x4, scoped, tag = 'scoped memory for tpu_custom_call.1']
    #allocation5 [shape = 's32[1]{0}', space=sflag, size = 0x4, scoped, tag = 'scoped memory for tpu_custom_call.1']
    #allocation6 [shape = 'u8[65536]{0}', space=vmem, size = 0x10000, scoped, tag = 'input window, operand 1, single buffered']
    #allocation7 [shape = 's32[1]{0}', space=sflag, size = 0x4, scoped, tag = 'scoped memory for tpu_custom_call.1']
    #allocation8 [shape = 'u8[16384]{0}', space=vmem, size = 0x4000, scoped, tag = 'input window, operand 2, single buffered']
    #allocation9 [shape = 'u8[65536]{0}', space=vmem, size = 0x10000, scoped, tag = 'input window, operand 3, single buffered']
    #allocation10 [shape = 's32[1]{0}', space=sflag, size = 0x4, scoped, tag = 'scoped memory for tpu_custom_call.1']
    #allocation11 [shape = 'u8[4096]{0}', space=vmem, size = 0x1000, scoped, tag = 'output window, operand 0, single buffered']
    %10 = vsyncpa [#allocation4], 0
    %11 = vsyncpa [#allocation7], 0
    %12 = vsyncpa [#allocation10], 0
    %13 = vsyncpa [#allocation5], 0
    // Predicated region
    $region2: #{tpu_custom_call.1} parent=1 // pred_check
      _
    $region3: #{tpu_custom_call.1} parent=1 // pred_check_branch
      %15 = sbr.rel (0) target = $region5
    $region4: #{tpu_custom_call.1} parent=1 // pred_region
      %s17 = ssub.s32 128, 128
      %18 = vsyncadd [#allocation4], %s17
      %s20 = sshll.u32 [#allocation3], 4
      %s21 = int_to_ptr.vmem [resolvable:$true] %s20
      %23 = dma.hbm_to_vmem [thread:$0]  %s0, 128, %s21, [#allocation4]
    $region5: #{tpu_custom_call.1} parent=1 // pred_fallthru
      _
    // Predicated region
    $region6: #{tpu_custom_call.1} parent=1 // pred_check
      _
    $region7: #{tpu_custom_call.1} parent=1 // pred_check_branch
      %25 = sbr.rel (0) target = $region9
    $region8: #{tpu_custom_call.1} parent=1 // pred_region
      %s27 = ssub.s32 2048, 2048
      %28 = vsyncadd [#allocation7], %s27
      %s29 = sshll.u32 [#allocation6], 4
      %s30 = int_to_ptr.vmem [resolvable:$true] %s29
      %35 = dma.hbm_to_vmem [thread:$0]  %s1, 2048, %s30, [#allocation7], 128, 128, 8
    $region9: #{tpu_custom_call.1} parent=1 // pred_fallthru
      _
    // Predicated region
    $region10: #{tpu_custom_call.1} parent=1 // pred_check
      _
    $region11: #{tpu_custom_call.1} parent=1 // pred_check_branch
      %37 = sbr.rel (0) target = $region13
    $region12: #{tpu_custom_call.1} parent=1 // pred_region
      %s39 = ssub.s32 512, 512
      %40 = vsyncadd [#allocation7], %s39
      %s41 = sshll.u32 [#allocation8], 4
      %s42 = int_to_ptr.vmem [resolvable:$true] %s41
      %47 = dma.hbm_to_vmem [thread:$0]  %s2, 512, %s42, [#allocation7], 128, 128, 8
    $region13: #{tpu_custom_call.1} parent=1 // pred_fallthru
      _
    // Predicated region
    $region14: #{tpu_custom_call.1} parent=1 // pred_check
      _
    $region15: #{tpu_custom_call.1} parent=1 // pred_check_branch
      %49 = sbr.rel (0) target = $region17
    $region16: #{tpu_custom_call.1} parent=1 // pred_region
      %s51 = ssub.s32 2048, 2048
      %52 = vsyncadd [#allocation10], %s51
      %s53 = sshll.u32 [#allocation9], 4
      %s54 = int_to_ptr.vmem [resolvable:$true] %s53
      %59 = dma.hbm_to_vmem [thread:$0]  %s3, 2048, %s54, [#allocation10], 128, 128, 8
    $region17: #{tpu_custom_call.1} parent=1 // pred_fallthru
      _
    // Predicated region
    $region18: #{tpu_custom_call.1} parent=1 // pred_check
      _
    $region19: #{tpu_custom_call.1} parent=1 // pred_check_branch
      %61 = sbr.rel (0) target = $region21
    $region20: #{tpu_custom_call.1} parent=1 // pred_region
      _
    $region21: #{tpu_custom_call.1} parent=1 // pred_fallthru
      _
    // Predicated region
    $region22: #{tpu_custom_call.1} parent=1 // pred_check
      _
    $region23: #{tpu_custom_call.1} parent=1 // pred_check_branch
      %63 = sbr.rel (0) target = $region25
    $region24: #{tpu_custom_call.1} parent=1 // pred_region
      %64 = dma.done [#allocation4], 128
    $region25: #{tpu_custom_call.1} parent=1 // pred_fallthru
      _
    // Predicated region
    $region26: #{tpu_custom_call.1} parent=1 // pred_check
      _
    $region27: #{tpu_custom_call.1} parent=1 // pred_check_branch
      %66 = sbr.rel (0) target = $region29
    $region28: #{tpu_custom_call.1} parent=1 // pred_region
      %67 = dma.done [#allocation7], 2048
    $region29: #{tpu_custom_call.1} parent=1 // pred_fallthru
      _
    // Predicated region
    $region30: #{tpu_custom_call.1} parent=1 // pred_check
      _
    $region31: #{tpu_custom_call.1} parent=1 // pred_check_branch
      %69 = sbr.rel (0) target = $region33
    $region32: #{tpu_custom_call.1} parent=1 // pred_region
      %70 = dma.done [#allocation7], 512
    $region33: #{tpu_custom_call.1} parent=1 // pred_fallthru
      _
    // Predicated region
    $region34: #{tpu_custom_call.1} parent=1 // pred_check
      _
    $region35: #{tpu_custom_call.1} parent=1 // pred_check_branch
      %72 = sbr.rel (0) target = $region37
    $region36: #{tpu_custom_call.1} parent=1 // pred_region
      %73 = dma.done [#allocation10], 2048
    $region37: #{tpu_custom_call.1} parent=1 // pred_fallthru
      _
    %p76 = scmp.eq.s32.totalorder 0, 0
    // Predicated region
    $region38: #{tpu_custom_call.1} parent=1 // pred_check
      %p77 = pneg %p76
    $region39: #{tpu_custom_call.1} parent=1 // pred_check_branch
      %79 = sbr.rel (%p77) target = $region41
    $region40: #{tpu_custom_call.1} parent=1 // pred_region
      %v80 = vld [vmem:[%s4] sm:$0x1]
      %v82 = vlaneseq
      %v83 = vshrl.u32 %v82, 7
      %v84 = vsub.s32 0, %v83
      %v85 = vrot.slane %v80, %v84
      %87 = vst [vmem:[#allocation2] sm:$0xff] %v85
    $region41: #{tpu_custom_call.1} parent=1 // pred_fallthru
      _
    %v88 = vld [vmem:[#allocation6] sm:$0xff]
    %v89 = vld [vmem:[#allocation6 + $0x8] sm:$0xff]
    %v90 = vld [vmem:[#allocation6 + $0x10] sm:$0xff]
    %v91 = vld [vmem:[#allocation6 + $0x18] sm:$0xff]
    %v92 = vld [vmem:[#allocation6 + $0x20] sm:$0xff]
    %v93 = vld [vmem:[#allocation6 + $0x28] sm:$0xff]
    %v94 = vld [vmem:[#allocation6 + $0x30] sm:$0xff]
    %v95 = vld [vmem:[#allocation6 + $0x38] sm:$0xff]
    %v96 = vld [vmem:[#allocation6 + $0x40] sm:$0xff]
    %v97 = vld [vmem:[#allocation6 + $0x48] sm:$0xff]
    %v98 = vld [vmem:[#allocation6 + $0x50] sm:$0xff]
    %v99 = vld [vmem:[#allocation6 + $0x58] sm:$0xff]
    %v100 = vld [vmem:[#allocation6 + $0x60] sm:$0xff]
    %v101 = vld [vmem:[#allocation6 + $0x68] sm:$0xff]
    %v102 = vld [vmem:[#allocation6 + $0x70] sm:$0xff]
    %v103 = vld [vmem:[#allocation6 + $0x78] sm:$0xff]
    %v104 = vld [vmem:[#allocation8] sm:$0xff]
    %v105 = vld [vmem:[#allocation8 + $0x8] sm:$0xff]
    %v106 = vld [vmem:[#allocation8 + $0x10] sm:$0xff]
    %v107 = vld [vmem:[#allocation8 + $0x18] sm:$0xff]
    %vm108 = vnez %v104
    %vm109 = vnez %v105
    %vm110 = vnez %v106
    %vm111 = vnez %v107
    %v112 = vld [vmem:[#allocation9] sm:$0xff]
    %v113 = vld [vmem:[#allocation9 + $0x8] sm:$0xff]
    %v114 = vld [vmem:[#allocation9 + $0x10] sm:$0xff]
    %v115 = vld [vmem:[#allocation9 + $0x18] sm:$0xff]
    %v116 = vld [vmem:[#allocation9 + $0x20] sm:$0xff]
    %v117 = vld [vmem:[#allocation9 + $0x28] sm:$0xff]
    %v118 = vld [vmem:[#allocation9 + $0x30] sm:$0xff]
    %v119 = vld [vmem:[#allocation9 + $0x38] sm:$0xff]
    %v120 = vld [vmem:[#allocation9 + $0x40] sm:$0xff]
    %v121 = vld [vmem:[#allocation9 + $0x48] sm:$0xff]
    %v122 = vld [vmem:[#allocation9 + $0x50] sm:$0xff]
    %v123 = vld [vmem:[#allocation9 + $0x58] sm:$0xff]
    %v124 = vld [vmem:[#allocation9 + $0x60] sm:$0xff]
    %v125 = vld [vmem:[#allocation9 + $0x68] sm:$0xff]
    %v126 = vld [vmem:[#allocation9 + $0x70] sm:$0xff]
    %v127 = vld [vmem:[#allocation9 + $0x78] sm:$0xff]
    %v128 = vsel %vm108, 16843009, 0
    %v129 = vsel %vm109, 16843009, 0
    %v130 = vsel %vm110, 16843009, 0
    %v131 = vsel %vm111, 16843009, 0
    %v132 = vunpack.c.0.s8 %v128
    %v133 = vunpack.c.1.s8 %v128
    %v134 = vunpack.c.2.s8 %v128
    %v135 = vunpack.c.3.s8 %v128
    %v136 = vunpack.c.0.s8 %v129
    %v137 = vunpack.c.1.s8 %v129
    %v138 = vunpack.c.2.s8 %v129
    %v139 = vunpack.c.3.s8 %v129
    %v140 = vunpack.c.0.s8 %v130
    %v141 = vunpack.c.1.s8 %v130
    %v142 = vunpack.c.2.s8 %v130
    %v143 = vunpack.c.3.s8 %v130
    %v144 = vunpack.c.0.s8 %v131
    %v145 = vunpack.c.1.s8 %v131
    %v146 = vunpack.c.2.s8 %v131
    %v147 = vunpack.c.3.s8 %v131
    %v148 = vpack.c.b16 %v132, %v132
    %v149 = vpack.c.b8 %v148, %v148
    %v150 = vpack.c.b16 %v133, %v133
    %v151 = vpack.c.b8 %v150, %v150
    %v152 = vpack.c.b16 %v134, %v134
    %v153 = vpack.c.b8 %v152, %v152
    %v154 = vpack.c.b16 %v135, %v135
    %v155 = vpack.c.b8 %v154, %v154
    %v156 = vpack.c.b16 %v136, %v136
    %v157 = vpack.c.b8 %v156, %v156
    %v158 = vpack.c.b16 %v137, %v137
    %v159 = vpack.c.b8 %v158, %v158
    %v160 = vpack.c.b16 %v138, %v138
    %v161 = vpack.c.b8 %v160, %v160
    %v162 = vpack.c.b16 %v139, %v139
    %v163 = vpack.c.b8 %v162, %v162
    %v164 = vpack.c.b16 %v140, %v140
    %v165 = vpack.c.b8 %v164, %v164
    %v166 = vpack.c.b16 %v141, %v141
    %v167 = vpack.c.b8 %v166, %v166
    %v168 = vpack.c.b16 %v142, %v142
    %v169 = vpack.c.b8 %v168, %v168
    %v170 = vpack.c.b16 %v143, %v143
    %v171 = vpack.c.b8 %v170, %v170
    %v172 = vpack.c.b16 %v144, %v144
    %v173 = vpack.c.b8 %v172, %v172
    %v174 = vpack.c.b16 %v145, %v145
    %v175 = vpack.c.b8 %v174, %v174
    %v176 = vpack.c.b16 %v146, %v146
    %v177 = vpack.c.b8 %v176, %v176
    %v178 = vpack.c.b16 %v147, %v147
    %v179 = vpack.c.b8 %v178, %v178
    %vm180 = vnez %v149
    %vm181 = vnez %v151
    %vm182 = vnez %v153
    %vm183 = vnez %v155
    %vm184 = vnez %v157
    %vm185 = vnez %v159
    %vm186 = vnez %v161
    %vm187 = vnez %v163
    %vm188 = vnez %v165
    %vm189 = vnez %v167
    %vm190 = vnez %v169
    %vm191 = vnez %v171
    %vm192 = vnez %v173
    %vm193 = vnez %v175
    %vm194 = vnez %v177
    %vm195 = vnez %v179
    %v196 = vsel %vm180, 16843009, 0
    %v197 = vsel %vm181, 16843009, 0
    %v198 = vsel %vm182, 16843009, 0
    %v199 = vsel %vm183, 16843009, 0
    %v200 = vsel %vm184, 16843009, 0
    %v201 = vsel %vm185, 16843009, 0
    %v202 = vsel %vm186, 16843009, 0
    %v203 = vsel %vm187, 16843009, 0
    %v204 = vsel %vm188, 16843009, 0
    %v205 = vsel %vm189, 16843009, 0
    %v206 = vsel %vm190, 16843009, 0
    %v207 = vsel %vm191, 16843009, 0
    %v208 = vsel %vm192, 16843009, 0
    %v209 = vsel %vm193, 16843009, 0
    %v210 = vsel %vm194, 16843009, 0
    %v211 = vsel %vm195, 16843009, 0
    %v212 = vunpack.c.0.s8 %v196
    %v213 = vunpack.c.0.s8 %v197
    %v214 = vunpack.c.0.s8 %v198
    %v215 = vunpack.c.0.s8 %v199
    %v216 = vunpack.c.0.s8 %v200
    %v217 = vunpack.c.0.s8 %v201
    %v218 = vunpack.c.0.s8 %v202
    %v219 = vunpack.c.0.s8 %v203
    %v220 = vunpack.c.0.s8 %v204
    %v221 = vunpack.c.0.s8 %v205
    %v222 = vunpack.c.0.s8 %v206
    %v223 = vunpack.c.0.s8 %v207
    %v224 = vunpack.c.0.s8 %v208
    %v225 = vunpack.c.0.s8 %v209
    %v226 = vunpack.c.0.s8 %v210
    %v227 = vunpack.c.0.s8 %v211
    %vm228 = vcmp.ne.s32.totalorder %v212, 0
    %vm229 = vcmp.ne.s32.totalorder %v213, 0
    %vm230 = vcmp.ne.s32.totalorder %v214, 0
    %vm231 = vcmp.ne.s32.totalorder %v215, 0
    %vm232 = vcmp.ne.s32.totalorder %v216, 0
    %vm233 = vcmp.ne.s32.totalorder %v217, 0
    %vm234 = vcmp.ne.s32.totalorder %v218, 0
    %vm235 = vcmp.ne.s32.totalorder %v219, 0
    %vm236 = vcmp.ne.s32.totalorder %v220, 0
    %vm237 = vcmp.ne.s32.totalorder %v221, 0
    %vm238 = vcmp.ne.s32.totalorder %v222, 0
    %vm239 = vcmp.ne.s32.totalorder %v223, 0
    %vm240 = vcmp.ne.s32.totalorder %v224, 0
    %vm241 = vcmp.ne.s32.totalorder %v225, 0
    %vm242 = vcmp.ne.s32.totalorder %v226, 0
    %vm243 = vcmp.ne.s32.totalorder %v227, 0
    %v244 = vsel %vm228, %v88, %v112
    %v245 = vsel %vm229, %v89, %v113
    %v246 = vsel %vm230, %v90, %v114
    %v247 = vsel %vm231, %v91, %v115
    %v248 = vsel %vm232, %v92, %v116
    %v249 = vsel %vm233, %v93, %v117
    %v250 = vsel %vm234, %v94, %v118
    %v251 = vsel %vm235, %v95, %v119
    %v252 = vsel %vm236, %v96, %v120
    %v253 = vsel %vm237, %v97, %v121
    %v254 = vsel %vm238, %v98, %v122
    %v255 = vsel %vm239, %v99, %v123
    %v256 = vsel %vm240, %v100, %v124
    %v257 = vsel %vm241, %v101, %v125
    %v258 = vsel %vm242, %v102, %v126
    %v259 = vsel %vm243, %v103, %v127
    %v260 = vand.u32 2147483647, %v88
    %v261 = vand.u32 2147483647, %v89
    %v262 = vand.u32 2147483647, %v90
    %v263 = vand.u32 2147483647, %v91
    %v264 = vand.u32 2147483647, %v92
    %v265 = vand.u32 2147483647, %v93
    %v266 = vand.u32 2147483647, %v94
    %v267 = vand.u32 2147483647, %v95
    %v268 = vand.u32 2147483647, %v96
    %v269 = vand.u32 2147483647, %v97
    %v270 = vand.u32 2147483647, %v98
    %v271 = vand.u32 2147483647, %v99
    %v272 = vand.u32 2147483647, %v100
    %v273 = vand.u32 2147483647, %v101
    %v274 = vand.u32 2147483647, %v102
    %v275 = vand.u32 2147483647, %v103
    %vm276 = vcmp.lt.f32.partialorder %v260, 0.3
    %vm277 = vcmp.lt.f32.partialorder %v261, 0.3
    %vm278 = vcmp.lt.f32.partialorder %v262, 0.3
    %vm279 = vcmp.lt.f32.partialorder %v263, 0.3
    %vm280 = vcmp.lt.f32.partialorder %v264, 0.3
    %vm281 = vcmp.lt.f32.partialorder %v265, 0.3
    %vm282 = vcmp.lt.f32.partialorder %v266, 0.3
    %vm283 = vcmp.lt.f32.partialorder %v267, 0.3
    %vm284 = vcmp.lt.f32.partialorder %v268, 0.3
    %vm285 = vcmp.lt.f32.partialorder %v269, 0.3
    %vm286 = vcmp.lt.f32.partialorder %v270, 0.3
    %vm287 = vcmp.lt.f32.partialorder %v271, 0.3
    %vm288 = vcmp.lt.f32.partialorder %v272, 0.3
    %vm289 = vcmp.lt.f32.partialorder %v273, 0.3
    %vm290 = vcmp.lt.f32.partialorder %v274, 0.3
    %vm291 = vcmp.lt.f32.partialorder %v275, 0.3
    %v292 = vsel %vm276, 0.0, %v244
    %v293 = vsel %vm277, 0.0, %v245
    %v294 = vsel %vm278, 0.0, %v246
    %v295 = vsel %vm279, 0.0, %v247
    %v296 = vsel %vm280, 0.0, %v248
    %v297 = vsel %vm281, 0.0, %v249
    %v298 = vsel %vm282, 0.0, %v250
    %v299 = vsel %vm283, 0.0, %v251
    %v300 = vsel %vm284, 0.0, %v252
    %v301 = vsel %vm285, 0.0, %v253
    %v302 = vsel %vm286, 0.0, %v254
    %v303 = vsel %vm287, 0.0, %v255
    %v304 = vsel %vm288, 0.0, %v256
    %v305 = vsel %vm289, 0.0, %v257
    %v306 = vsel %vm290, 0.0, %v258
    %v307 = vsel %vm291, 0.0, %v259
    %v308 = vld [vmem:[#allocation2] sm:$0xff]
    %v309 = vld [vmem:[#allocation3] sm:$0xff]
    %310 = vmatprep.subr.mxu0 0.0
    %311 = vmatpush1.xpose.msra.mxu0 %v307
    %312 = vmatprep.subr.mxu0 0.0
    %313 = vmatpush1.xpose.msra.mxu0 %v306
    %314 = vmatprep.subr.mxu0 0.0
    %315 = vmatpush1.xpose.msra.mxu0 %v305
    %316 = vmatprep.subr.mxu0 0.0
    %317 = vmatpush1.xpose.msra.mxu0 %v304
    %318 = vmatprep.subr.mxu0 0.0
    %319 = vmatpush1.xpose.msra.mxu0 %v303
    %320 = vmatprep.subr.mxu0 0.0
    %321 = vmatpush1.xpose.msra.mxu0 %v302
    %322 = vmatprep.subr.mxu0 0.0
    %323 = vmatpush1.xpose.msra.mxu0 %v301
    %324 = vmatprep.subr.mxu0 0.0
    %325 = vmatpush1.xpose.msra.mxu0 %v300
    %326 = vmatprep.subr.mxu0 0.0
    %327 = vmatpush1.xpose.msra.mxu0 %v299
    %328 = vmatprep.subr.mxu0 0.0
    %329 = vmatpush1.xpose.msra.mxu0 %v298
    %330 = vmatprep.subr.mxu0 0.0
    %331 = vmatpush1.xpose.msra.mxu0 %v297
    %332 = vmatprep.subr.mxu0 0.0
    %333 = vmatpush1.xpose.msra.mxu0 %v296
    %334 = vmatprep.subr.mxu0 0.0
    %335 = vmatpush1.xpose.msra.mxu0 %v295
    %336 = vmatprep.subr.mxu0 0.0
    %337 = vmatpush1.xpose.msra.mxu0 %v294
    %338 = vmatprep.subr.mxu0 0.0
    %339 = vmatpush1.xpose.msra.mxu0 %v293
    %340 = vmatprep.subr.mxu0 0.0
    %341 = vmatpush1.xpose.msra.mxu0 %v292
    %342 = vmatprep.subr.mxu0 0.0
    %343 = vmatpush2.xpose.msra.mxu0 0.0
    %344 = vmatprep.subr.mxu0 0.0
    %345 = vmatpush2.xpose.msra.mxu0 0.0
    %346 = vmatprep.subr.mxu0 0.0
    %347 = vmatpush2.xpose.msra.mxu0 0.0
    %348 = vmatprep.subr.mxu0 0.0
    %349 = vmatpush2.xpose.msra.mxu0 0.0
    %350 = vmatprep.subr.mxu0 0.0
    %351 = vmatpush2.xpose.msra.mxu0 0.0
    %352 = vmatprep.subr.mxu0 0.0
    %353 = vmatpush2.xpose.msra.mxu0 0.0
    %354 = vmatprep.subr.mxu0 0.0
    %355 = vmatpush2.xpose.msra.mxu0 0.0
    %356 = vmatprep.subr.mxu0 0.0
    %357 = vmatpush2.xpose.msra.mxu0 0.0
    %358 = vmatprep.subr.mxu0 0.0
    %359 = vmatpush2.xpose.msra.mxu0 0.0
    %360 = vmatprep.subr.mxu0 0.0
    %361 = vmatpush2.xpose.msra.mxu0 0.0
    %362 = vmatprep.subr.mxu0 0.0
    %363 = vmatpush2.xpose.msra.mxu0 0.0
    %364 = vmatprep.subr.mxu0 0.0
    %365 = vmatpush2.xpose.msra.mxu0 0.0
    %366 = vmatprep.subr.mxu0 0.0
    %367 = vmatpush2.xpose.msra.mxu0 0.0
    %368 = vmatprep.subr.mxu0 0.0
    %369 = vmatpush2.xpose.msra.mxu0 0.0
    %370 = vmatprep.subr.mxu0 0.0
    %371 = vmatpush2.xpose.msra.mxu0 0.0
    %372 = vmatprep.subr.mxu0 0.0
    %373 = vmatpush2.xpose.msra.mxu0 0.0
    %374 = vmatprep.mubr.f32.mxu0 0.0
    %375 = vmatmul.mubr.f32.gmra.mxu0 %v309
    %v376 = vpop.f32.mrf.mxu0
    %v377 = vadd.f32 0.0, %v376
    %v378 = vpop.f32.mrf.mxu0
    %379 = vdwg.mxu0
    %v380 = vadd.f32 %v308, %v377
    %381 = vst [vmem:[#allocation2] sm:$0xff] %v380
    // Predicated region
    $region42: #{tpu_custom_call.1} parent=1 // pred_check
      %p382 = pneg %p76
    $region43: #{tpu_custom_call.1} parent=1 // pred_check_branch
      %384 = sbr.rel (%p382) target = $region45
    $region44: #{tpu_custom_call.1} parent=1 // pred_region
      %v385 = vld [vmem:[#allocation2] sm:$0xff]
      %386 = vst [vmem:[#allocation11] sm:$0xff] %v385
    $region45: #{tpu_custom_call.1} parent=1 // pred_fallthru
      _
    // Predicated region
    $region46: #{tpu_custom_call.1} parent=1 // pred_check
      _
    $region47: #{tpu_custom_call.1} parent=1 // pred_check_branch
      %388 = sbr.rel (0) target = $region49
    $region48: #{tpu_custom_call.1} parent=1 // pred_region
      %s390 = ssub.s32 128, 128
      %391 = vsyncadd [#allocation5], %s390
      %s393 = sshll.u32 [#allocation11], 4
      %s394 = int_to_ptr.vmem [resolvable:$true] %s393
      %396 = dma.vmem_to_hbm [thread:$0]  %s394, 128, %s5, [#allocation5]
    $region49: #{tpu_custom_call.1} parent=1 // pred_fallthru
      _
    // Predicated region
    $region50: #{tpu_custom_call.1} parent=1 // pred_check
      _
    $region51: #{tpu_custom_call.1} parent=1 // pred_check_branch
      %398 = sbr.rel (0) target = $region53
    $region52: #{tpu_custom_call.1} parent=1 // pred_region
      %399 = dma.done [#allocation5], 128
    $region53: #{tpu_custom_call.1} parent=1 // pred_fallthru
      _
    %400 = vsyncpa [#allocation4], 1
    %401 = vsyncpa [#allocation7], 1
    %402 = vsyncpa [#allocation10], 1
    %403 = vsyncpa [#allocation5], 1

</llo_original>
